<compile_context>
chip_gen: v7x
topology: tpu7x:2x2x1
jax: 0.10.0
libtpu: 0.0.40
codegen_flags: <defaults>
</compile_context>

<pallas_src>
import jax
import jax.numpy as jnp
from jax.experimental import pallas as pl
from jax.experimental.pallas import tpu as pltpu


def _round_up(x, m):
    return ((x + m - 1) // m) * m


def _unpool_kernel(inv_ref, h_ref, out_ref, acc_ref):
    # inv_ref: VMEM (TM, 1) int32  -- inverse permutation slice for this row tile
    # h_ref:   VMEM (TK, D)        -- K-tile of the pooled features
    # out_ref: VMEM (TM, D)        -- output row tile (resident across K axis)
    # acc_ref: VMEM (TM, D) f32    -- accumulator scratch
    k = pl.program_id(1)

    @pl.when(k == 0)
    def _():
        acc_ref[...] = jnp.zeros_like(acc_ref)

    tm = inv_ref.shape[0]
    tk = h_ref.shape[0]

    inv_tile = inv_ref[...]                                        # (TM, 1) int32
    col = jax.lax.broadcasted_iota(jnp.int32, (tm, tk), 1) + k * tk  # (TM, TK)
    onehot = (inv_tile == col).astype(h_ref.dtype)                 # (TM, TK), 0/1

    acc_ref[...] += jnp.dot(onehot, h_ref[...],
                            preferred_element_type=jnp.float32)

    @pl.when(k == pl.num_programs(1) - 1)
    def _():
        out_ref[...] = acc_ref[...].astype(out_ref.dtype)


def unpool_forward(g, h, pre_h, idx, *, tm_target=256, tk_target=512):
    """Pallas implementation of Unpool.forward. Returns (g, new_h)."""
    del pre_h  # unused by the reference module
    N = g.shape[0]
    K, D = h.shape
    itemsize = jnp.dtype(h.dtype).itemsize

    # sublane multiple for the dtype (f32: 8, bf16/f16: 16, int8/fp8: 32)
    sub = 8 if itemsize >= 4 else (16 if itemsize == 2 else 32)

    # Tile sizes: as large as reasonable, clamped to the (padded) problem size.
    TM = min(tm_target, _round_up(N, sub))
    TK = min(tk_target, _round_up(K, sub))
    N_pad = _round_up(N, TM)
    K_pad = _round_up(K, TK)

    # Glue: inverse mapping inv[n] = j such that idx[j] == n, else -1.
    # (Duplicate idx entries: last-write-wins, matching torch's scatter-assign.)
    idx = idx.astype(jnp.int32)
    inv = jnp.full((N_pad,), -1, dtype=jnp.int32)
    inv = inv.at[idx].set(jnp.arange(K, dtype=jnp.int32))
    inv_2d = inv.reshape(N_pad, 1)

    # Zero-pad h along K so the K grid axis divides evenly (padded rows are
    # never selected since inv < K, and they are zero anyway).
    h_pad = h if K_pad == K else jnp.pad(h, ((0, K_pad - K), (0, 0)))

    grid = (N_pad // TM, K_pad // TK)

    grid_spec = pltpu.PrefetchScalarGridSpec(
        num_scalar_prefetch=0,
        grid=grid,
        in_specs=[
            pl.BlockSpec((TM, 1), lambda i, k: (i, 0)),   # inv tile
            pl.BlockSpec((TK, D), lambda i, k: (k, 0)),   # h tile
        ],
        out_specs=pl.BlockSpec((TM, D), lambda i, k: (i, 0)),
        scratch_shapes=[pltpu.VMEM((TM, D), jnp.float32)],
    )

    # VMEM budget: double-buffered inputs + double-buffered output + acc.
    tile_bytes = (2 * (TM * 1 * 4 + TK * D * itemsize)
                  + 2 * TM * D * itemsize
                  + TM * D * 4)
    vmem_limit = int(min(max(2 * tile_bytes + (2 << 20), 16 << 20), 64 << 20))

    cost = pl.CostEstimate(
        flops=2 * N_pad * K_pad * D,
        transcendentals=0,
        bytes_accessed=(N_pad * D + grid[0] * K_pad * D) * itemsize + N_pad * 4,
    )

    new_h_pad = pl.pallas_call(
        _unpool_kernel,
        out_shape=jax.ShapeDtypeStruct((N_pad, D), h.dtype),
        grid_spec=grid_spec,
        compiler_params=pltpu.CompilerParams(
            dimension_semantics=("parallel", "arbitrary"),
            vmem_limit_bytes=vmem_limit,
        ),
        cost_estimate=cost,
    )(inv_2d, h_pad)

    new_h = new_h_pad[:N] if N_pad != N else new_h_pad
    return g, new_h


def _check(key, N, K, D):
    kg, kh, kp, ki = jax.random.split(key, 4)
    g = jax.random.normal(kg, (N, 32), dtype=jnp.float32)        # passed through
    h = jax.random.normal(kh, (K, D), dtype=jnp.float32)
    pre_h = jax.random.normal(kp, (N, D), dtype=jnp.float32)     # unused, as in torch
    idx = jax.random.permutation(ki, N)[:K].astype(jnp.int32)    # unique rows to fill

    g_out, new_h = unpool_forward(g, h, pre_h, idx)
    jax.block_until_ready((g_out, new_h))

    # Reference (plain JAX scatter == torch indexing assign for unique idx).
    ref = jnp.zeros((N, D), dtype=h.dtype).at[idx].set(h)
    assert g_out.shape == g.shape and jnp.array_equal(g_out, g)
    assert new_h.shape == (N, D) and new_h.dtype == h.dtype
    assert jnp.allclose(new_h, ref), f"mismatch for N={N} K={K} D={D}"


if __name__ == "__main__":
    key = jax.random.PRNGKey(0)
    k1, k2 = jax.random.split(key)

    # Small, lane-aligned case (matches the module's typical pooled-graph use).
    _check(k1, N=16, K=8, D=128)
    # Non-aligned case to exercise the padding / tiling path.
    _check(k2, N=37, K=10, D=256)

    print("KERNEL_OK")
</pallas_src>

<mosaic_0001>
module attributes {stable_mosaic.version = 11 : i64} {
  func.func @_unpool_kernel(%arg0: i32, %arg1: i32, %arg2: memref<16x1xi32, #tpu.memory_space<vmem>>, %arg3: memref<8x128xf32, #tpu.memory_space<vmem>>, %arg4: memref<16x128xf32, #tpu.memory_space<vmem>>, %arg5: memref<16x128xf32, #tpu.memory_space<vmem>>) attributes {dimension_semantics = [#tpu.dimension_semantics<parallel>, #tpu.dimension_semantics<arbitrary>], iteration_bounds = array<i64: 1, 1>, scalar_prefetch = 0 : i64, scratch_operands = 1 : i64, tpu.core_type = #tpu.core_type<tc>, window_params = [{transform_indices = @transform_0, window_bounds = array<i64: 16, 1>}, {transform_indices = @transform_1, window_bounds = array<i64: 8, 128>}, {transform_indices = @transform_2, window_bounds = array<i64: 16, 128>}]} {
    %c0_i32 = arith.constant 0 : i32
    %0 = arith.cmpi eq, %arg1, %c0_i32 : i32
    %1 = arith.extui %0 : i1 to i32
    %c0_i32_0 = arith.constant 0 : i32
    %2 = arith.cmpi ne, %1, %c0_i32_0 : i32
    scf.if %2 {
      %cst_10 = arith.constant 0.000000e+00 : f32
      %20 = vector.broadcast %cst_10 : f32 to vector<16x128xf32>
      %c0_11 = arith.constant 0 : index
      %c0_12 = arith.constant 0 : index
      %21 = vector.load %arg5[%c0_11, %c0_12] : memref<16x128xf32, #tpu.memory_space<vmem>>, vector<16x128xf32>
      tpu.vector_store %arg5[%c0_11, %c0_12], %20 {strides = array<i32>} : memref<16x128xf32, #tpu.memory_space<vmem>>, vector<16x128xf32>,
    } else {
    }
    %c0 = arith.constant 0 : index
    %c0_1 = arith.constant 0 : index
    %3 = vector.load %arg2[%c0, %c0_1] : memref<16x1xi32, #tpu.memory_space<vmem>>, vector<16x1xi32>
    %4 = tpu.iota {dimensions = array<i32: 1>} : vector<16x8xi32>
    %c8_i32 = arith.constant 8 : i32
    %5 = arith.muli %arg1, %c8_i32 : i32
    %6 = vector.broadcast %5 : i32 to vector<16x8xi32>
    %7 = arith.addi %4, %6 : vector<16x8xi32>
    %8 = vector.broadcast %3 : vector<16x1xi32> to vector<16x8xi32>
    %9 = arith.cmpi eq, %8, %7 : vector<16x8xi32>
    %10 = arith.extui %9 : vector<16x8xi1> to vector<16x8xi32>
    %11 = arith.sitofp %10 : vector<16x8xi32> to vector<16x8xf32>
    %c0_2 = arith.constant 0 : index
    %c0_3 = arith.constant 0 : index
    %12 = vector.load %arg5[%c0_2, %c0_3] : memref<16x128xf32, #tpu.memory_space<vmem>>, vector<16x128xf32>
    %c0_4 = arith.constant 0 : index
    %c0_5 = arith.constant 0 : index
    %13 = vector.load %arg3[%c0_4, %c0_5] : memref<8x128xf32, #tpu.memory_space<vmem>>, vector<8x128xf32>
    %cst = arith.constant dense<0.000000e+00> : vector<16x128xf32>
    %14 = tpu.matmul %11, %13, %cst {dimension_numbers = #tpu.dot_dimension_numbers<[1], [0], [0], [1], [0, 0, 1, 1], [], []>} : vector<16x8xf32>, vector<8x128xf32>, vector<16x128xf32> -> vector<16x128xf32>
    %15 = arith.addf %12, %14 : vector<16x128xf32>
    %c0_6 = arith.constant 0 : index
    %c0_7 = arith.constant 0 : index
    %16 = vector.load %arg5[%c0_6, %c0_7] : memref<16x128xf32, #tpu.memory_space<vmem>>, vector<16x128xf32>
    tpu.vector_store %arg5[%c0_6, %c0_7], %15 {strides = array<i32>} : memref<16x128xf32, #tpu.memory_space<vmem>>, vector<16x128xf32>,
    %c0_i32_8 = arith.constant 0 : i32
    %17 = arith.cmpi eq, %arg1, %c0_i32_8 : i32
    %18 = arith.extui %17 : i1 to i32
    %c0_i32_9 = arith.constant 0 : i32
    %19 = arith.cmpi ne, %18, %c0_i32_9 : i32
    scf.if %19 {
      %c0_10 = arith.constant 0 : index
      %c0_11 = arith.constant 0 : index
      %20 = vector.load %arg5[%c0_10, %c0_11] : memref<16x128xf32, #tpu.memory_space<vmem>>, vector<16x128xf32>
      %c0_12 = arith.constant 0 : index
      %c0_13 = arith.constant 0 : index
      %21 = vector.load %arg4[%c0_12, %c0_13] : memref<16x128xf32, #tpu.memory_space<vmem>>, vector<16x128xf32>
      tpu.vector_store %arg4[%c0_12, %c0_13], %20 {strides = array<i32>} : memref<16x128xf32, #tpu.memory_space<vmem>>, vector<16x128xf32>,
    } else {
    }
    return
  }
  func.func @transform_0(%arg0: i32, %arg1: i32) -> (i32, i32) {
    %c0_i32 = arith.constant 0 : i32
    %c0_i32_0 = arith.constant 0 : i32
    return %arg0, %c0_i32 : i32, i32
  }
  func.func @transform_1(%arg0: i32, %arg1: i32) -> (i32, i32) {
    %c0_i32 = arith.constant 0 : i32
    %c0_i32_0 = arith.constant 0 : i32
    return %arg1, %c0_i32 : i32, i32
  }
  func.func @transform_2(%arg0: i32, %arg1: i32) -> (i32, i32) {
    %c0_i32 = arith.constant 0 : i32
    %c0_i32_0 = arith.constant 0 : i32
    return %arg0, %c0_i32 : i32, i32
  }
}

</mosaic_0001>

<llo_original>
// kernel: tpu_custom_call.1
$region0: #{tpu_custom_call.1}
  #allocation0 [shape = 'u32[]', space=smem, size = 0x4, offset = 0x4, fixed_abs, tag = 'smem constant byte address 0x4 - core index']
  #allocation1 [shape = 'u32[144,128]{1,0:T(1,128)}', space=vmem, size = 0x12000, scoped, tag = 'internal scratch']
  #allocation2 [shape = 'f32[16,128]{1,0:T(8,128)}', space=vmem, size = 0x2000, scoped, tag = 'scratch operand']
  %s0 = inlined_call_operand.vmem [shape: s32[16,1], index: 0, kind: input, shape index: {}]
  %s1 = inlined_call_operand.vmem [shape: f32[8,128], index: 1, kind: input, shape index: {}]
  %s2 = inlined_call_operand.hbm [shape: f32[16,128], index: 2, kind: output, shape index: {}]
  %s3 = sld [smem:[#allocation0]]
  $region26: #{tpu_custom_call.1} parent=0
    _
  %s5 = ssub.s32 1, %s3
  %s6 = scalar_select 0, %s5, %s3
  $region1: #{tpu_custom_call.1} parent=0
    #allocation3 [shape = 'u8[8192]{0}', space=vmem, size = 0x2000, scoped, tag = 'output window, operand 0, single buffered']
    #allocation4 [shape = 's32[1]{0}', space=sflag, size = 0x4, scoped, tag = 'scoped memory for tpu_custom_call.1']
    %7 = vsyncpa [#allocation4], 0
    // Predicated region
    $region2: #{tpu_custom_call.1} parent=1 // pred_check
      _
    $region3: #{tpu_custom_call.1} parent=1 // pred_check_branch
      %9 = sbr.rel (0) target = $region5
    $region4: #{tpu_custom_call.1} parent=1 // pred_region
      _
    $region5: #{tpu_custom_call.1} parent=1 // pred_fallthru
      _
    // Predicated region
    $region6: #{tpu_custom_call.1} parent=1 // pred_check
      _
    $region7: #{tpu_custom_call.1} parent=1 // pred_check_branch
      %11 = sbr.rel (0) target = $region9
    $region8: #{tpu_custom_call.1} parent=1 // pred_region
      _
    $region9: #{tpu_custom_call.1} parent=1 // pred_fallthru
      _
    %p12 = scmp.eq.s32.totalorder 0, 0
    // Predicated region
    $region10: #{tpu_custom_call.1} parent=1 // pred_check
      %p13 = pneg %p12
    $region11: #{tpu_custom_call.1} parent=1 // pred_check_branch
      %15 = sbr.rel (%p13) target = $region13
    $region12: #{tpu_custom_call.1} parent=1 // pred_region
      %16 = vst [vmem:[#allocation2] sm:$0xff] 0.0
      %17 = vst [vmem:[#allocation2 + $0x8] sm:$0xff] 0.0
    $region13: #{tpu_custom_call.1} parent=1 // pred_fallthru
      _
    %v18 = vld [vmem:[%s0] sm:$0xff]
    %v19 = vld [vmem:[%s0 + $0x8] sm:$0xff]
    %v20 = vlaneseq
    %v21 = vand.u32 %v20, 127
    %s22 = smul.u32 0, 8
    %v23 = vstv %s22
    %v24 = vadd.s32 %v21, %v23
    %25 = vset.pattern.permute.xlu0 0
    %26 = vperm.xlu0 %25, %v18
    %v27 = vpop.permute.xlu0 %26
    %28 = vset.pattern.permute.xlu0 0
    %29 = vperm.xlu0 %28, %v19
    %v30 = vpop.permute.xlu0 %29
    %vm31 = vcmp.eq.s32.totalorder %v27, %v24
    %vm32 = vcmp.eq.s32.totalorder %v30, %v24
    %v33 = vsel %vm31, 1, 0
    %v34 = vsel %vm32, 1, 0
    %v35 = vcvt.s32.f32 %v33
    %v36 = vcvt.s32.f32 %v34
    %v37 = vld [vmem:[#allocation2] sm:$0xff]
    %v38 = vld [vmem:[#allocation2 + $0x8] sm:$0xff]
    %v39 = vld [vmem:[%s1] sm:$0xff]
    %vm40 = vcmask 64512
    %v42 = vsel %vm40, %v35, 0
    %v45 = vsel %vm40, %v36, 0
    %47 = vmatprep.subr.mxu0 0.0
    %48 = vmatpush1.msra.mxu0 %v39
    %49 = vmatprep.subr.mxu0 0.0
    %50 = vmatpush1.msra.mxu0 0.0
    %51 = vmatprep.subr.mxu0 0.0
    %52 = vmatpush1.msra.mxu0 0.0
    %53 = vmatprep.subr.mxu0 0.0
    %54 = vmatpush1.msra.mxu0 0.0
    %55 = vmatprep.subr.mxu0 0.0
    %56 = vmatpush1.msra.mxu0 0.0
    %57 = vmatprep.subr.mxu0 0.0
    %58 = vmatpush1.msra.mxu0 0.0
    %59 = vmatprep.subr.mxu0 0.0
    %60 = vmatpush1.msra.mxu0 0.0
    %61 = vmatprep.subr.mxu0 0.0
    %62 = vmatpush1.msra.mxu0 0.0
    %63 = vmatprep.subr.mxu0 0.0
    %64 = vmatpush1.msra.mxu0 0.0
    %65 = vmatprep.subr.mxu0 0.0
    %66 = vmatpush1.msra.mxu0 0.0
    %67 = vmatprep.subr.mxu0 0.0
    %68 = vmatpush1.msra.mxu0 0.0
    %69 = vmatprep.subr.mxu0 0.0
    %70 = vmatpush1.msra.mxu0 0.0
    %71 = vmatprep.subr.mxu0 0.0
    %72 = vmatpush1.msra.mxu0 0.0
    %73 = vmatprep.subr.mxu0 0.0
    %74 = vmatpush1.msra.mxu0 0.0
    %75 = vmatprep.subr.mxu0 0.0
    %76 = vmatpush1.msra.mxu0 0.0
    %77 = vmatprep.subr.mxu0 0.0
    %78 = vmatpush1.msra.mxu0 0.0
    %79 = vmatprep.subr.mxu0 0.0
    %80 = vmatpush1.msra.mxu0 0.0
    %81 = vmatprep.subr.mxu0 0.0
    %82 = vmatpush1.msra.mxu0 0.0
    %83 = vmatprep.subr.mxu0 0.0
    %84 = vmatpush1.msra.mxu0 0.0
    %85 = vmatprep.subr.mxu0 0.0
    %86 = vmatpush1.msra.mxu0 0.0
    %87 = vmatprep.subr.mxu0 0.0
    %88 = vmatpush1.msra.mxu0 0.0
    %89 = vmatprep.subr.mxu0 0.0
    %90 = vmatpush1.msra.mxu0 0.0
    %91 = vmatprep.subr.mxu0 0.0
    %92 = vmatpush1.msra.mxu0 0.0
    %93 = vmatprep.subr.mxu0 0.0
    %94 = vmatpush1.msra.mxu0 0.0
    %95 = vmatprep.subr.mxu0 0.0
    %96 = vmatpush1.msra.mxu0 0.0
    %97 = vmatprep.subr.mxu0 0.0
    %98 = vmatpush1.msra.mxu0 0.0
    %99 = vmatprep.subr.mxu0 0.0
    %100 = vmatpush1.msra.mxu0 0.0
    %101 = vmatprep.subr.mxu0 0.0
    %102 = vmatpush1.msra.mxu0 0.0
    %103 = vmatprep.subr.mxu0 0.0
    %104 = vmatpush1.msra.mxu0 0.0
    %105 = vmatprep.subr.mxu0 0.0
    %106 = vmatpush1.msra.mxu0 0.0
    %107 = vmatprep.subr.mxu0 0.0
    %108 = vmatpush1.msra.mxu0 0.0
    %109 = vmatprep.subr.mxu0 0.0
    %110 = vmatpush1.msra.mxu0 0.0
    %111 = vmatprep.mubr.f32.mxu0 0.0
    %112 = vmatmul.mubr.f32.gmra.mrb[0].mxu0 %v42
    %v113 = vpop.f32.mrb[0].mxu0
    %v114 = vadd.f32 0.0, %v113
    %v115 = vpop.f32.mrb[0].mxu0
    %116 = vmatprep.mubr.f32.mxu0 0.0
    %117 = vmatmul.mubr.f32.gmra.mrb[0].mxu0 %v45
    %v118 = vpop.f32.mrb[0].mxu0
    %v119 = vadd.f32 0.0, %v118
    %v120 = vpop.f32.mrb[0].mxu0
    %121 = vdwg.mxu0
    %v122 = vadd.f32 %v37, %v114
    %v123 = vadd.f32 %v38, %v119
    %124 = vst [vmem:[#allocation2] sm:$0xff] %v122
    %125 = vst [vmem:[#allocation2 + $0x8] sm:$0xff] %v123
    // Predicated region
    $region14: #{tpu_custom_call.1} parent=1 // pred_check
      %p126 = pneg %p12
    $region15: #{tpu_custom_call.1} parent=1 // pred_check_branch
      %128 = sbr.rel (%p126) target = $region17
    $region16: #{tpu_custom_call.1} parent=1 // pred_region
      %v129 = vld [vmem:[#allocation2] sm:$0xff]
      %v130 = vld [vmem:[#allocation2 + $0x8] sm:$0xff]
      %131 = vst [vmem:[#allocation3] sm:$0xff] %v129
      %132 = vst [vmem:[#allocation3 + $0x8] sm:$0xff] %v130
    $region17: #{tpu_custom_call.1} parent=1 // pred_fallthru
      _
    // Predicated region
    $region18: #{tpu_custom_call.1} parent=1 // pred_check
      _
    $region19: #{tpu_custom_call.1} parent=1 // pred_check_branch
      %134 = sbr.rel (0) target = $region21
    $region20: #{tpu_custom_call.1} parent=1 // pred_region
      %s136 = ssub.s32 256, 256
      %137 = vsyncadd [#allocation4], %s136
      %s138 = sshll.u32 [#allocation3], 4
      %s139 = int_to_ptr.vmem [resolvable:$true] %s138
      %144 = dma.vmem_to_hbm [thread:$0]  %s139, 256, %s2, [#allocation4], 128, 128, 8
    $region21: #{tpu_custom_call.1} parent=1 // pred_fallthru
      _
    // Predicated region
    $region22: #{tpu_custom_call.1} parent=1 // pred_check
      _
    $region23: #{tpu_custom_call.1} parent=1 // pred_check_branch
      %146 = sbr.rel (0) target = $region25
    $region24: #{tpu_custom_call.1} parent=1 // pred_region
      %147 = dma.done [#allocation4], 256
    $region25: #{tpu_custom_call.1} parent=1 // pred_fallthru
      _
    %148 = vsyncpa [#allocation4], 1

</llo_original>
